<compile_context>
chip_gen: v6e
topology: v6e:2x2x1
jax: 0.10.0
libtpu: 0.0.40
codegen_flags: <defaults>
</compile_context>

<pallas_src>
import math
import jax
import jax.numpy as jnp
from jax.experimental import pallas as pl
from jax.experimental.pallas import tpu as pltpu


def _round_up(x: int, m: int) -> int:
    return ((x + m - 1) // m) * m


def make_task_decoder_kernel(layer_layout, apply_softmax: bool):
    """Build a Pallas kernel for an MLP given a static layer layout.

    layer_layout: tuple of (row_offset, fan_in, fan_out) into the packed param slab.
    Kernel ref order: x_ref, packed_params_ref, out_ref.
    """
    n_layers = len(layer_layout)

    def kernel(x_ref, p_ref, out_ref):
        h = x_ref[...]  # f32 [B, E]

        for i, (r0, fan_in, fan_out) in enumerate(layer_layout):
            # Static slices into the packed slab (zero-cost views; known offsets).
            w = p_ref[r0:r0 + fan_in, 0:fan_out]                 # [fan_in, fan_out]
            b = p_ref[r0 + fan_in:r0 + fan_in + 1, 0:fan_out]    # [1, fan_out]
            h = jnp.dot(h, w, preferred_element_type=jnp.float32) + b
            if i < n_layers - 1:
                h = jnp.maximum(h, 0.0)  # ReLU on hidden layers only

        if apply_softmax:
            # torch.softmax(y, 1): softmax over feature (last) axis, numerically stable.
            h = h - jnp.max(h, axis=1, keepdims=True)
            e = jnp.exp(h)
            h = e * pl.reciprocal(jnp.sum(e, axis=1, keepdims=True), approx=True)

        out_ref[...] = h.astype(out_ref.dtype)

    return kernel


class TaskDecoderPallas:
    """JAX/Pallas port of the PyTorch TaskDecoder module."""

    def __init__(self, layers, task_embedding_size, pred_type, task_dim, key):
        self.pred_type = pred_type
        self.layers = list(layers)
        self.task_dim = task_dim
        self._apply_softmax = pred_type == "task_id"

        dims = [task_embedding_size] + self.layers + [task_dim]

        # --- Per-layer parameters (PyTorch nn.Linear default init) -----------------
        self.params = []  # list of (w [in, out], b [out])
        for i in range(len(dims) - 1):
            fan_in, fan_out = dims[i], dims[i + 1]
            key, kw, kb = jax.random.split(key, 3)
            bound = 1.0 / math.sqrt(fan_in)
            w = jax.random.uniform(kw, (fan_in, fan_out), jnp.float32, -bound, bound)
            b = jax.random.uniform(kb, (fan_out,), jnp.float32, -bound, bound)
            self.params.append((w, b))

        # --- Pack everything into one (8,128)-aligned f32 slab ---------------------
        lane_w = _round_up(max(dims[1:]), 128)  # all out dims fit in 128 lanes here
        blocks = []
        layout = []
        row = 0
        for w, b in self.params:
            fan_in, fan_out = w.shape
            blk_rows = _round_up(fan_in + 1, 8)  # weights rows + 1 bias row, padded to x8
            blk = jnp.zeros((blk_rows, lane_w), jnp.float32)
            blk = blk.at[:fan_in, :fan_out].set(w)
            blk = blk.at[fan_in, :fan_out].set(b)
            blocks.append(blk)
            layout.append((row, fan_in, fan_out))
            row += blk_rows
        self._packed = jnp.concatenate(blocks, axis=0)  # [R_total, lane_w]
        self._layout = tuple(layout)

        # --- Build kernel once; jit the forward so pallas_call is lowered once -----
        self._kernel = make_task_decoder_kernel(self._layout, self._apply_softmax)
        self._jit_forward = jax.jit(self._forward_impl)

    def _forward_impl(self, task_embedding, packed):
        batch = task_embedding.shape[0]

        flops = 2 * batch * sum(fi * fo for _, fi, fo in self._layout)
        transcendentals = batch * self.task_dim if self._apply_softmax else 0
        bytes_accessed = 4 * (task_embedding.size + packed.size + batch * self.task_dim)

        vmem_spec = pl.BlockSpec(memory_space=pltpu.MemorySpace.VMEM)
        return pl.pallas_call(
            self._kernel,
            out_shape=jax.ShapeDtypeStruct((batch, self.task_dim), jnp.float32),
            in_specs=[vmem_spec, vmem_spec],
            out_specs=vmem_spec,
            cost_estimate=pl.CostEstimate(
                flops=flops,
                transcendentals=transcendentals,
                bytes_accessed=bytes_accessed,
            ),
        )(task_embedding, packed)

    def __call__(self, task_embedding):
        # Cached jit: retrace only on a new batch shape; otherwise fast-path dispatch.
        return self._jit_forward(task_embedding, self._packed)

    def reference(self, task_embedding):
        """Pure-JAX reference of the same forward pass (for correctness check)."""
        h = task_embedding.astype(jnp.float32)
        for i, (w, b) in enumerate(self.params):
            h = h @ w + b[None, :]
            if i < len(self.params) - 1:
                h = jnp.maximum(h, 0.0)
        if self._apply_softmax:
            h = jax.nn.softmax(h, axis=1)
        return h


if __name__ == "__main__":
    key = jax.random.PRNGKey(0)
    key, k_in, k_params = jax.random.split(key, 3)

    # Small shapes consistent with the module's forward:
    batch = 2
    task_embedding_size = 32
    layers = [32, 16]
    task_dim = 8
    pred_type = "task_id"  # exercises the softmax branch too

    decoder = TaskDecoderPallas(layers, task_embedding_size, pred_type, task_dim, k_params)

    task_embedding = jax.random.normal(k_in, (batch, task_embedding_size), jnp.float32)

    y = decoder(task_embedding)
    y = jax.block_until_ready(y)

    # Second call hits the cached jit / pallas_call (no rebuild).
    y2 = jax.block_until_ready(decoder(task_embedding))

    y_ref = decoder.reference(task_embedding)
    assert y.shape == (batch, task_dim)
    # approx=True reciprocal in the softmax -> tolerance relaxed from 1e-5 to ~2e-3.
    assert jnp.allclose(y, y_ref, atol=2e-3, rtol=2e-3), "Pallas output mismatch vs JAX reference"
    assert jnp.allclose(y2, y, atol=0.0, rtol=0.0), "Cached forward differs from first call"

    print("KERNEL_OK")
</pallas_src>

<mosaic_0001>
module attributes {stable_mosaic.version = 11 : i64} {
  func.func @kernel(%arg0: memref<2x32xf32, #tpu.memory_space<vmem>>, %arg1: memref<104x128xf32, #tpu.memory_space<vmem>>, %arg2: memref<2x8xf32, #tpu.memory_space<vmem>>) attributes {dimension_semantics = [], scalar_prefetch = 0 : i64, scratch_operands = 0 : i64, tpu.core_type = #tpu.core_type<tc>} {
    %c0 = arith.constant 0 : index
    %c0_0 = arith.constant 0 : index
    %0 = vector.load %arg0[%c0, %c0_0] : memref<2x32xf32, #tpu.memory_space<vmem>>, vector<2x32xf32>
    %c0_1 = arith.constant 0 : index
    %c0_2 = arith.constant 0 : index
    %1 = vector.load %arg1[%c0_1, %c0_2] : memref<104x128xf32, #tpu.memory_space<vmem>>, vector<32x32xf32>
    %c32 = arith.constant 32 : index
    %c0_3 = arith.constant 0 : index
    %2 = vector.load %arg1[%c32, %c0_3] : memref<104x128xf32, #tpu.memory_space<vmem>>, vector<1x32xf32>
    %cst = arith.constant dense<0.000000e+00> : vector<2x32xf32>
    %3 = tpu.matmul %0, %1, %cst {dimension_numbers = #tpu.dot_dimension_numbers<[1], [0], [0], [1], [0, 0, 1, 1], [], []>} : vector<2x32xf32>, vector<32x32xf32>, vector<2x32xf32> -> vector<2x32xf32>
    %4 = vector.broadcast %2 : vector<1x32xf32> to vector<2x32xf32>
    %5 = arith.addf %3, %4 : vector<2x32xf32>
    %cst_4 = arith.constant 0.000000e+00 : f32
    %6 = vector.broadcast %cst_4 : f32 to vector<2x32xf32>
    %7 = arith.maximumf %5, %6 : vector<2x32xf32>
    %c40 = arith.constant 40 : index
    %c0_5 = arith.constant 0 : index
    %8 = vector.load %arg1[%c40, %c0_5] : memref<104x128xf32, #tpu.memory_space<vmem>>, vector<32x16xf32>
    %c72 = arith.constant 72 : index
    %c0_6 = arith.constant 0 : index
    %9 = vector.load %arg1[%c72, %c0_6] : memref<104x128xf32, #tpu.memory_space<vmem>>, vector<1x16xf32>
    %cst_7 = arith.constant dense<0.000000e+00> : vector<2x16xf32>
    %10 = tpu.matmul %7, %8, %cst_7 {dimension_numbers = #tpu.dot_dimension_numbers<[1], [0], [0], [1], [0, 0, 1, 1], [], []>} : vector<2x32xf32>, vector<32x16xf32>, vector<2x16xf32> -> vector<2x16xf32>
    %11 = vector.broadcast %9 : vector<1x16xf32> to vector<2x16xf32>
    %12 = arith.addf %10, %11 : vector<2x16xf32>
    %cst_8 = arith.constant 0.000000e+00 : f32
    %13 = vector.broadcast %cst_8 : f32 to vector<2x16xf32>
    %14 = arith.maximumf %12, %13 : vector<2x16xf32>
    %c80 = arith.constant 80 : index
    %c0_9 = arith.constant 0 : index
    %15 = vector.load %arg1[%c80, %c0_9] : memref<104x128xf32, #tpu.memory_space<vmem>>, vector<16x8xf32>
    %c96 = arith.constant 96 : index
    %c0_10 = arith.constant 0 : index
    %16 = vector.load %arg1[%c96, %c0_10] : memref<104x128xf32, #tpu.memory_space<vmem>>, vector<1x8xf32>
    %cst_11 = arith.constant dense<0.000000e+00> : vector<2x8xf32>
    %17 = tpu.matmul %14, %15, %cst_11 {dimension_numbers = #tpu.dot_dimension_numbers<[1], [0], [0], [1], [0, 0, 1, 1], [], []>} : vector<2x16xf32>, vector<16x8xf32>, vector<2x8xf32> -> vector<2x8xf32>
    %18 = vector.broadcast %16 : vector<1x8xf32> to vector<2x8xf32>
    %19 = arith.addf %17, %18 : vector<2x8xf32>
    %cst_12 = arith.constant dense<0xFF800000> : vector<2xf32>
    %20 = vector.multi_reduction <maximumf>, %19, %cst_12 [1] : vector<2x8xf32> to vector<2xf32>
    %21 = vector.shape_cast %20 : vector<2xf32> to vector<2x1xf32>
    %22 = vector.broadcast %21 : vector<2x1xf32> to vector<2x8xf32>
    %23 = arith.subf %19, %22 : vector<2x8xf32>
    %24 = math.exp %23 : vector<2x8xf32>
    %cst_13 = arith.constant dense<0.000000e+00> : vector<2xf32>
    %25 = vector.multi_reduction <add>, %24, %cst_13 [1] : vector<2x8xf32> to vector<2xf32>
    %26 = vector.shape_cast %25 : vector<2xf32> to vector<2x1xf32>
    %27 = tpu.reciprocal %26 {approx = true} : vector<2x1xf32> -> vector<2x1xf32>
    %28 = vector.broadcast %27 : vector<2x1xf32> to vector<2x8xf32>
    %29 = arith.mulf %24, %28 : vector<2x8xf32>
    %c0_14 = arith.constant 0 : index
    %c0_15 = arith.constant 0 : index
    %30 = vector.load %arg2[%c0_14, %c0_15] : memref<2x8xf32, #tpu.memory_space<vmem>>, vector<2x8xf32>
    tpu.vector_store %arg2[%c0_14, %c0_15], %29 {strides = array<i32>} : memref<2x8xf32, #tpu.memory_space<vmem>>, vector<2x8xf32>,
    return
  }
}

</mosaic_0001>

<llo_original>
// kernel: _forward_impl.1
$region0: #{_forward_impl.1}
  #allocation0 [shape = 'u32[]', space=smem, size = 0x4, offset = 0x4, fixed_abs, tag = 'smem constant byte address 0x4 - core index']
  #allocation1 [shape = 'u32[144,128]{1,0:T(1,128)}', space=vmem, size = 0x12000, scoped, tag = 'internal scratch']
  %s0 = inlined_call_operand.hbm [shape: f32[2,32], index: 0, kind: input, shape index: {}]
  %s1 = inlined_call_operand.hbm [shape: f32[104,128], index: 1, kind: input, shape index: {}]
  %s2 = inlined_call_operand.hbm [shape: f32[2,8], index: 2, kind: output, shape index: {}]
  %s3 = sld [smem:[#allocation0]]
  $region26: #{_forward_impl.1} parent=0
    _
  %s5 = ssub.s32 1, %s3
  %s6 = scalar_select 0, %s5, %s3
  $region1: #{_forward_impl.1} parent=0
    #allocation2 [shape = 'u8[1024]{0}', space=vmem, size = 0x400, scoped, tag = 'input window, operand 0, single buffered']
    #allocation3 [shape = 's32[1]{0}', space=sflag, size = 0x4, scoped, tag = 'scoped memory for _forward_impl.1']
    #allocation4 [shape = 's32[1]{0}', space=sflag, size = 0x4, scoped, tag = 'scoped memory for _forward_impl.1']
    #allocation5 [shape = 'u8[53248]{0}', space=vmem, size = 0xd000, scoped, tag = 'input window, operand 1, single buffered']
    #allocation6 [shape = 's32[1]{0}', space=sflag, size = 0x4, scoped, tag = 'scoped memory for _forward_impl.1']
    #allocation7 [shape = 'u8[1024]{0}', space=vmem, size = 0x400, scoped, tag = 'output window, operand 0, single buffered']
    %7 = vsyncpa [#allocation3], 0
    %8 = vsyncpa [#allocation6], 0
    %9 = vsyncpa [#allocation4], 0
    // Predicated region
    $region2: #{_forward_impl.1} parent=1 // pred_check
      _
    $region3: #{_forward_impl.1} parent=1 // pred_check_branch
      %11 = sbr.rel (0) target = $region5
    $region4: #{_forward_impl.1} parent=1 // pred_region
      %s13 = ssub.s32 32, 32
      %14 = vsyncadd [#allocation3], %s13
      %s16 = sshll.u32 [#allocation2], 4
      %s17 = int_to_ptr.vmem [resolvable:$true] %s16
      %19 = dma.hbm_to_vmem [thread:$0]  %s0, 32, %s17, [#allocation3]
    $region5: #{_forward_impl.1} parent=1 // pred_fallthru
      _
    // Predicated region
    $region6: #{_forward_impl.1} parent=1 // pred_check
      _
    $region7: #{_forward_impl.1} parent=1 // pred_check_branch
      %21 = sbr.rel (0) target = $region9
    $region8: #{_forward_impl.1} parent=1 // pred_region
      %s23 = ssub.s32 1664, 1664
      %24 = vsyncadd [#allocation6], %s23
      %s25 = sshll.u32 [#allocation5], 4
      %s26 = int_to_ptr.vmem [resolvable:$true] %s25
      %31 = dma.hbm_to_vmem [thread:$0]  %s1, 1664, %s26, [#allocation6], 128, 128, 8
    $region9: #{_forward_impl.1} parent=1 // pred_fallthru
      _
    // Predicated region
    $region10: #{_forward_impl.1} parent=1 // pred_check
      _
    $region11: #{_forward_impl.1} parent=1 // pred_check_branch
      %33 = sbr.rel (0) target = $region13
    $region12: #{_forward_impl.1} parent=1 // pred_region
      %34 = dma.done [#allocation3], 32
    $region13: #{_forward_impl.1} parent=1 // pred_fallthru
      _
    // Predicated region
    $region14: #{_forward_impl.1} parent=1 // pred_check
      _
    $region15: #{_forward_impl.1} parent=1 // pred_check_branch
      %36 = sbr.rel (0) target = $region17
    $region16: #{_forward_impl.1} parent=1 // pred_region
      %37 = dma.done [#allocation6], 1664
    $region17: #{_forward_impl.1} parent=1 // pred_fallthru
      _
    %v38 = vld [vmem:[#allocation2] sm:$0x3]
    %v39 = vld [vmem:[#allocation5] sm:$0xff]
    %v40 = vld [vmem:[#allocation5 + $0x8] sm:$0xff]
    %v41 = vld [vmem:[#allocation5 + $0x10] sm:$0xff]
    %v42 = vld [vmem:[#allocation5 + $0x18] sm:$0xff]
    %v43 = vld [vmem:[#allocation5 + $0x20] sm:$0x1]
    %v44 = vlaneseq
    %v45 = vshrl.u32 %v44, 7
    %v46 = vsub.s32 0, %v45
    %v47 = vrot.slane %v43, %v46
    %vm48 = vcmask 261120
    %v50 = vsel %vm48, %v38, 0
    %52 = vmatprep.subr.mxu0 0.0
    %53 = vmatpush1.msra.mxu0 0.0
    %54 = vmatprep.subr.mxu0 0.0
    %55 = vmatpush1.msra.mxu0 0.0
    %56 = vmatprep.subr.mxu0 0.0
    %57 = vmatpush1.msra.mxu0 0.0
    %58 = vmatprep.subr.mxu0 0.0
    %59 = vmatpush1.msra.mxu0 0.0
    %60 = vmatprep.subr.mxu0 0.0
    %61 = vmatpush1.msra.mxu0 0.0
    %62 = vmatprep.subr.mxu0 0.0
    %63 = vmatpush1.msra.mxu0 0.0
    %64 = vmatprep.subr.mxu0 0.0
    %65 = vmatpush1.msra.mxu0 0.0
    %66 = vmatprep.subr.mxu0 0.0
    %67 = vmatpush1.msra.mxu0 0.0
    %68 = vmatprep.subr.mxu0 0.0
    %69 = vmatpush1.msra.mxu0 0.0
    %70 = vmatprep.subr.mxu0 0.0
    %71 = vmatpush1.msra.mxu0 0.0
    %72 = vmatprep.subr.mxu0 0.0
    %73 = vmatpush1.msra.mxu0 0.0
    %74 = vmatprep.subr.mxu0 0.0
    %75 = vmatpush1.msra.mxu0 0.0
    %76 = vmatprep.subr.mxu0 0.0
    %77 = vmatpush1.msra.mxu0 %v42
    %78 = vmatprep.subr.mxu0 0.0
    %79 = vmatpush1.msra.mxu0 %v41
    %80 = vmatprep.subr.mxu0 0.0
    %81 = vmatpush1.msra.mxu0 %v40
    %82 = vmatprep.subr.mxu0 0.0
    %83 = vmatpush1.msra.mxu0 %v39
    %84 = vmatprep.subr.mxu0 0.0
    %85 = vmatpush2.msra.mxu0 0.0
    %86 = vmatprep.subr.mxu0 0.0
    %87 = vmatpush2.msra.mxu0 0.0
    %88 = vmatprep.subr.mxu0 0.0
    %89 = vmatpush2.msra.mxu0 0.0
    %90 = vmatprep.subr.mxu0 0.0
    %91 = vmatpush2.msra.mxu0 0.0
    %92 = vmatprep.subr.mxu0 0.0
    %93 = vmatpush2.msra.mxu0 0.0
    %94 = vmatprep.subr.mxu0 0.0
    %95 = vmatpush2.msra.mxu0 0.0
    %96 = vmatprep.subr.mxu0 0.0
    %97 = vmatpush2.msra.mxu0 0.0
    %98 = vmatprep.subr.mxu0 0.0
    %99 = vmatpush2.msra.mxu0 0.0
    %100 = vmatprep.subr.mxu0 0.0
    %101 = vmatpush2.msra.mxu0 0.0
    %102 = vmatprep.subr.mxu0 0.0
    %103 = vmatpush2.msra.mxu0 0.0
    %104 = vmatprep.subr.mxu0 0.0
    %105 = vmatpush2.msra.mxu0 0.0
    %106 = vmatprep.subr.mxu0 0.0
    %107 = vmatpush2.msra.mxu0 0.0
    %108 = vmatprep.subr.mxu0 0.0
    %109 = vmatpush2.msra.mxu0 0.0
    %110 = vmatprep.subr.mxu0 0.0
    %111 = vmatpush2.msra.mxu0 0.0
    %112 = vmatprep.subr.mxu0 0.0
    %113 = vmatpush2.msra.mxu0 0.0
    %114 = vmatprep.subr.mxu0 0.0
    %115 = vmatpush2.msra.mxu0 0.0
    %116 = vmatprep.mubr.f32.mxu0 0.0
    %117 = vmatmul.mubr.f32.gmra.mxu0 %v50
    %v118 = vpop.f32.mrf.mxu0
    %v119 = vadd.f32 %v47, %v118
    %v120 = vpop.f32.mrf.mxu0
    %121 = vdwg.mxu0
    %v122 = vmax.f32 %v119, 0.0
    %v123 = vld [vmem:[#allocation5 + $0x28] sm:$0xff]
    %v124 = vld [vmem:[#allocation5 + $0x30] sm:$0xff]
    %v125 = vld [vmem:[#allocation5 + $0x38] sm:$0xff]
    %v126 = vld [vmem:[#allocation5 + $0x40] sm:$0xff]
    %v127 = vld [vmem:[#allocation5 + $0x48] sm:$0x1]
    %v128 = vlaneseq
    %v129 = vshrl.u32 %v128, 7
    %v130 = vsub.s32 0, %v129
    %v131 = vrot.slane %v127, %v130
    %v133 = vsel %vm48, %v122, 0
    %135 = vmatprep.subr.mxu0 0.0
    %136 = vmatpush1.msra.mxu0 0.0
    %137 = vmatprep.subr.mxu0 0.0
    %138 = vmatpush1.msra.mxu0 0.0
    %139 = vmatprep.subr.mxu0 0.0
    %140 = vmatpush1.msra.mxu0 0.0
    %141 = vmatprep.subr.mxu0 0.0
    %142 = vmatpush1.msra.mxu0 0.0
    %143 = vmatprep.subr.mxu0 0.0
    %144 = vmatpush1.msra.mxu0 0.0
    %145 = vmatprep.subr.mxu0 0.0
    %146 = vmatpush1.msra.mxu0 0.0
    %147 = vmatprep.subr.mxu0 0.0
    %148 = vmatpush1.msra.mxu0 0.0
    %149 = vmatprep.subr.mxu0 0.0
    %150 = vmatpush1.msra.mxu0 0.0
    %151 = vmatprep.subr.mxu0 0.0
    %152 = vmatpush1.msra.mxu0 0.0
    %153 = vmatprep.subr.mxu0 0.0
    %154 = vmatpush1.msra.mxu0 0.0
    %155 = vmatprep.subr.mxu0 0.0
    %156 = vmatpush1.msra.mxu0 0.0
    %157 = vmatprep.subr.mxu0 0.0
    %158 = vmatpush1.msra.mxu0 0.0
    %159 = vmatprep.subr.mxu0 0.0
    %160 = vmatpush1.msra.mxu0 %v126
    %161 = vmatprep.subr.mxu0 0.0
    %162 = vmatpush1.msra.mxu0 %v125
    %163 = vmatprep.subr.mxu0 0.0
    %164 = vmatpush1.msra.mxu0 %v124
    %165 = vmatprep.subr.mxu0 0.0
    %166 = vmatpush1.msra.mxu0 %v123
    %167 = vmatprep.subr.mxu0 0.0
    %168 = vmatpush2.msra.mxu0 0.0
    %169 = vmatprep.subr.mxu0 0.0
    %170 = vmatpush2.msra.mxu0 0.0
    %171 = vmatprep.subr.mxu0 0.0
    %172 = vmatpush2.msra.mxu0 0.0
    %173 = vmatprep.subr.mxu0 0.0
    %174 = vmatpush2.msra.mxu0 0.0
    %175 = vmatprep.subr.mxu0 0.0
    %176 = vmatpush2.msra.mxu0 0.0
    %177 = vmatprep.subr.mxu0 0.0
    %178 = vmatpush2.msra.mxu0 0.0
    %179 = vmatprep.subr.mxu0 0.0
    %180 = vmatpush2.msra.mxu0 0.0
    %181 = vmatprep.subr.mxu0 0.0
    %182 = vmatpush2.msra.mxu0 0.0
    %183 = vmatprep.subr.mxu0 0.0
    %184 = vmatpush2.msra.mxu0 0.0
    %185 = vmatprep.subr.mxu0 0.0
    %186 = vmatpush2.msra.mxu0 0.0
    %187 = vmatprep.subr.mxu0 0.0
    %188 = vmatpush2.msra.mxu0 0.0
    %189 = vmatprep.subr.mxu0 0.0
    %190 = vmatpush2.msra.mxu0 0.0
    %191 = vmatprep.subr.mxu0 0.0
    %192 = vmatpush2.msra.mxu0 0.0
    %193 = vmatprep.subr.mxu0 0.0
    %194 = vmatpush2.msra.mxu0 0.0
    %195 = vmatprep.subr.mxu0 0.0
    %196 = vmatpush2.msra.mxu0 0.0
    %197 = vmatprep.subr.mxu0 0.0
    %198 = vmatpush2.msra.mxu0 0.0
    %199 = vmatprep.mubr.f32.mxu0 0.0
    %200 = vmatmul.mubr.f32.gmra.mxu0 %v133
    %v201 = vpop.f32.mrf.mxu0
    %v202 = vadd.f32 %v131, %v201
    %v203 = vpop.f32.mrf.mxu0
    %204 = vdwg.mxu0
    %v205 = vmax.f32 %v202, 0.0
    %v206 = vld [vmem:[#allocation5 + $0x50] sm:$0xff]
    %v207 = vld [vmem:[#allocation5 + $0x58] sm:$0xff]
    %v208 = vld [vmem:[#allocation5 + $0x60] sm:$0x1]
    %v209 = vlaneseq
    %v210 = vshrl.u32 %v209, 7
    %v211 = vsub.s32 0, %v210
    %v212 = vrot.slane %v208, %v211
    %vm213 = vcmask 130048
    %v215 = vsel %vm213, %v205, 0
    %217 = vmatprep.subr.mxu0 0.0
    %218 = vmatpush1.msra.mxu0 0.0
    %219 = vmatprep.subr.mxu0 0.0
    %220 = vmatpush1.msra.mxu0 0.0
    %221 = vmatprep.subr.mxu0 0.0
    %222 = vmatpush1.msra.mxu0 0.0
    %223 = vmatprep.subr.mxu0 0.0
    %224 = vmatpush1.msra.mxu0 0.0
    %225 = vmatprep.subr.mxu0 0.0
    %226 = vmatpush1.msra.mxu0 0.0
    %227 = vmatprep.subr.mxu0 0.0
    %228 = vmatpush1.msra.mxu0 0.0
    %229 = vmatprep.subr.mxu0 0.0
    %230 = vmatpush1.msra.mxu0 0.0
    %231 = vmatprep.subr.mxu0 0.0
    %232 = vmatpush1.msra.mxu0 0.0
    %233 = vmatprep.subr.mxu0 0.0
    %234 = vmatpush1.msra.mxu0 0.0
    %235 = vmatprep.subr.mxu0 0.0
    %236 = vmatpush1.msra.mxu0 0.0
    %237 = vmatprep.subr.mxu0 0.0
    %238 = vmatpush1.msra.mxu0 0.0
    %239 = vmatprep.subr.mxu0 0.0
    %240 = vmatpush1.msra.mxu0 0.0
    %241 = vmatprep.subr.mxu0 0.0
    %242 = vmatpush1.msra.mxu0 0.0
    %243 = vmatprep.subr.mxu0 0.0
    %244 = vmatpush1.msra.mxu0 0.0
    %245 = vmatprep.subr.mxu0 0.0
    %246 = vmatpush1.msra.mxu0 %v207
    %247 = vmatprep.subr.mxu0 0.0
    %248 = vmatpush1.msra.mxu0 %v206
    %249 = vmatprep.subr.mxu0 0.0
    %250 = vmatpush2.msra.mxu0 0.0
    %251 = vmatprep.subr.mxu0 0.0
    %252 = vmatpush2.msra.mxu0 0.0
    %253 = vmatprep.subr.mxu0 0.0
    %254 = vmatpush2.msra.mxu0 0.0
    %255 = vmatprep.subr.mxu0 0.0
    %256 = vmatpush2.msra.mxu0 0.0
    %257 = vmatprep.subr.mxu0 0.0
    %258 = vmatpush2.msra.mxu0 0.0
    %259 = vmatprep.subr.mxu0 0.0
    %260 = vmatpush2.msra.mxu0 0.0
    %261 = vmatprep.subr.mxu0 0.0
    %262 = vmatpush2.msra.mxu0 0.0
    %263 = vmatprep.subr.mxu0 0.0
    %264 = vmatpush2.msra.mxu0 0.0
    %265 = vmatprep.subr.mxu0 0.0
    %266 = vmatpush2.msra.mxu0 0.0
    %267 = vmatprep.subr.mxu0 0.0
    %268 = vmatpush2.msra.mxu0 0.0
    %269 = vmatprep.subr.mxu0 0.0
    %270 = vmatpush2.msra.mxu0 0.0
    %271 = vmatprep.subr.mxu0 0.0
    %272 = vmatpush2.msra.mxu0 0.0
    %273 = vmatprep.subr.mxu0 0.0
    %274 = vmatpush2.msra.mxu0 0.0
    %275 = vmatprep.subr.mxu0 0.0
    %276 = vmatpush2.msra.mxu0 0.0
    %277 = vmatprep.subr.mxu0 0.0
    %278 = vmatpush2.msra.mxu0 0.0
    %279 = vmatprep.subr.mxu0 0.0
    %280 = vmatpush2.msra.mxu0 0.0
    %281 = vmatprep.mubr.f32.mxu0 0.0
    %282 = vmatmul.mubr.f32.gmra.mxu0 %v215
    %v283 = vpop.f32.mrf.mxu0
    %v284 = vadd.f32 %v212, %v283
    %v285 = vpop.f32.mrf.mxu0
    %286 = vdwg.mxu0
    %vm287 = vcmask 58368
    %v288 = vsel %vm287, %v284, -inf
    %289 = vmax.xlane.f32.xlu0 %v288
    %v290 = vpop.xlane.xlu0 %289
    %v291 = vsub.f32 %v284, %v290
    %v292 = vmul.f32 %v291, 1.442695
    %v293 = vpow.pop %v292
    %v294 = vsel %vm287, %v293, 0.0
    %295 = vadd.xlane.f32.xlu0 %v294
    %v296 = vpop.xlane.xlu0 %295
    %v297 = vrcp.pop %v296
    %v298 = vmul.f32 %v293, %v297
    %299 = vst.msk [vmem:[#allocation7] sm:$0x3] %vm287, %v298
    // Predicated region
    $region18: #{_forward_impl.1} parent=1 // pred_check
      _
    $region19: #{_forward_impl.1} parent=1 // pred_check_branch
      %301 = sbr.rel (0) target = $region21
    $region20: #{_forward_impl.1} parent=1 // pred_region
      %s303 = ssub.s32 32, 32
      %304 = vsyncadd [#allocation4], %s303
      %s306 = sshll.u32 [#allocation7], 4
      %s307 = int_to_ptr.vmem [resolvable:$true] %s306
      %309 = dma.vmem_to_hbm [thread:$0]  %s307, 32, %s2, [#allocation4]
    $region21: #{_forward_impl.1} parent=1 // pred_fallthru
      _
    // Predicated region
    $region22: #{_forward_impl.1} parent=1 // pred_check
      _
    $region23: #{_forward_impl.1} parent=1 // pred_check_branch
      %311 = sbr.rel (0) target = $region25
    $region24: #{_forward_impl.1} parent=1 // pred_region
      %312 = dma.done [#allocation4], 32
    $region25: #{_forward_impl.1} parent=1 // pred_fallthru
      _
    %313 = vsyncpa [#allocation3], 1
    %314 = vsyncpa [#allocation6], 1
    %315 = vsyncpa [#allocation4], 1

</llo_original>
